<compile_context>
chip_gen: v5e
topology: v5e:2x2
jax: 0.10.0
libtpu: 0.0.40
codegen_flags: <defaults>
</compile_context>

<pallas_src>
import jax
import jax.numpy as jnp
from jax.experimental import pallas as pl
from jax.experimental.pallas import tpu as pltpu


def _round_up(n, m):
    return ((n + m - 1) // m) * m


def pe_kernel(x_ref, p_ref, o_ref):
    # x_ref: (TB, 2)   p_ref: (2, F)   o_ref: (TB, 2*F)
    F = p_ref.shape[1]

    # K=2 "matmul" as VPU broadcast-FMA (no MXU involvement).
    x0 = x_ref[:, 0:1]          # (TB, 1)
    x1 = x_ref[:, 1:2]          # (TB, 1)
    p0 = p_ref[0:1, :]          # (1, F)
    p1 = p_ref[1:2, :]          # (1, F)
    xp = x0 * p0 + x1 * p1      # (TB, F), f32

    # Write the two halves directly (no lane-axis concatenate / extra temp).
    o_ref[:, :F] = jnp.sin(xp).astype(o_ref.dtype)
    o_ref[:, F:] = jnp.cos(xp).astype(o_ref.dtype)


def _choose_batch_tile(B, F, max_block_b):
    """Pick a batch tile (multiple of 8) keeping double-buffered VMEM ~16 MiB."""
    bytes_per_row = 4 * (2 + 2 * F)          # x row + output row, f32
    budget = 16 * 1024 * 1024                # per-pipeline-stage working set
    tb = budget // (2 * bytes_per_row)       # x2 for double buffering
    tb = max(8, (tb // 8) * 8)
    tb = min(tb, max_block_b)
    tb = min(tb, _round_up(B, 8))
    return tb


def pe_forward(x, P, *, block_b=4096):
    """x: (B, 2) float32, P: (2, F) float32 -> (B, 2*F) float32."""
    B, two = x.shape
    assert two == 2
    F = P.shape[1]

    TB = _choose_batch_tile(B, F, block_b)
    Bp = _round_up(B, TB)
    if Bp != B:
        x = jnp.pad(x, ((0, Bp - B), (0, 0)))

    grid = (Bp // TB,)

    out = pl.pallas_call(
        pe_kernel,
        out_shape=jax.ShapeDtypeStruct((Bp, 2 * F), x.dtype),
        grid_spec=pltpu.PrefetchScalarGridSpec(
            num_scalar_prefetch=0,
            grid=grid,
            in_specs=[
                pl.BlockSpec((TB, 2), lambda i: (i, 0)),   # x tile over batch
                pl.BlockSpec((2, F), lambda i: (0, 0)),    # P resident (grid-invariant)
            ],
            out_specs=pl.BlockSpec((TB, 2 * F), lambda i: (i, 0)),
        ),
        compiler_params=pltpu.CompilerParams(
            # 'parallel' -> grid sharded across TensorCores on v7x; no-op on v5e/v6e.
            dimension_semantics=("parallel",),
        ),
        cost_estimate=pl.CostEstimate(
            flops=4 * Bp * F,                       # 2 mul + 2 add per (row, feature)
            transcendentals=2 * Bp * F,             # sin + cos
            bytes_accessed=4 * (2 * Bp + 2 * F + 2 * Bp * F),
        ),
    )(x, P)

    if Bp != B:
        out = out[:B]
    return out


if __name__ == "__main__":
    key = jax.random.PRNGKey(0)
    kx, kp = jax.random.split(key)

    B, F = 8, 32
    # Deterministic synthetic inputs / encoding matrix (P is a buffer in the
    # PyTorch module; here it is initialized in-script).
    x = jax.random.normal(kx, (B, 2), dtype=jnp.float32)
    P = jax.random.normal(kp, (2, F), dtype=jnp.float32) * 3.0

    out = pe_forward(x, P)
    out = jax.block_until_ready(out)

    # Reference check against plain JAX (same semantics as the torch forward).
    x_ = x @ P
    ref = jnp.concatenate([jnp.sin(x_), jnp.cos(x_)], axis=1)
    assert out.shape == (B, 2 * F)
    assert jnp.allclose(out, ref, atol=1e-5, rtol=1e-5)

    print("KERNEL_OK")
</pallas_src>

<mosaic_0001>
module attributes {stable_mosaic.version = 11 : i64} {
  func.func @pe_kernel(%arg0: i32, %arg1: memref<8x2xf32, #tpu.memory_space<vmem>>, %arg2: memref<2x32xf32, #tpu.memory_space<vmem>>, %arg3: memref<8x64xf32, #tpu.memory_space<vmem>>) attributes {dimension_semantics = [#tpu.dimension_semantics<parallel>], iteration_bounds = array<i64: 1>, scalar_prefetch = 0 : i64, scratch_operands = 0 : i64, tpu.core_type = #tpu.core_type<tc>, window_params = [{transform_indices = @transform_0, window_bounds = array<i64: 8, 2>}, {pipeline_mode = #tpu.pipeline_mode<synchronous>, transform_indices = @transform_1, window_bounds = array<i64: 2, 32>}, {transform_indices = @transform_2, window_bounds = array<i64: 8, 64>}]} {
    %c0 = arith.constant 0 : index
    %c0_0 = arith.constant 0 : index
    %0 = vector.load %arg1[%c0, %c0_0] : memref<8x2xf32, #tpu.memory_space<vmem>>, vector<8x1xf32>
    %c0_1 = arith.constant 0 : index
    %c1 = arith.constant 1 : index
    %1 = vector.load %arg1[%c0_1, %c1] : memref<8x2xf32, #tpu.memory_space<vmem>>, vector<8x1xf32>
    %c0_2 = arith.constant 0 : index
    %c0_3 = arith.constant 0 : index
    %2 = vector.load %arg2[%c0_2, %c0_3] : memref<2x32xf32, #tpu.memory_space<vmem>>, vector<1x32xf32>
    %c1_4 = arith.constant 1 : index
    %c0_5 = arith.constant 0 : index
    %3 = vector.load %arg2[%c1_4, %c0_5] : memref<2x32xf32, #tpu.memory_space<vmem>>, vector<1x32xf32>
    %4 = vector.broadcast %0 : vector<8x1xf32> to vector<8x32xf32>
    %5 = vector.broadcast %2 : vector<1x32xf32> to vector<8x32xf32>
    %6 = arith.mulf %4, %5 : vector<8x32xf32>
    %7 = vector.broadcast %1 : vector<8x1xf32> to vector<8x32xf32>
    %8 = vector.broadcast %3 : vector<1x32xf32> to vector<8x32xf32>
    %9 = arith.mulf %7, %8 : vector<8x32xf32>
    %10 = arith.addf %6, %9 : vector<8x32xf32>
    %11 = math.sin %10 : vector<8x32xf32>
    %c0_6 = arith.constant 0 : index
    %c0_7 = arith.constant 0 : index
    %12 = vector.load %arg3[%c0_6, %c0_7] : memref<8x64xf32, #tpu.memory_space<vmem>>, vector<8x32xf32>
    tpu.vector_store %arg3[%c0_6, %c0_7], %11 {strides = array<i32>} : memref<8x64xf32, #tpu.memory_space<vmem>>, vector<8x32xf32>,
    %13 = math.cos %10 : vector<8x32xf32>
    %c0_8 = arith.constant 0 : index
    %c32 = arith.constant 32 : index
    %14 = vector.load %arg3[%c0_8, %c32] : memref<8x64xf32, #tpu.memory_space<vmem>>, vector<8x32xf32>
    tpu.vector_store %arg3[%c0_8, %c32], %13 {strides = array<i32>} : memref<8x64xf32, #tpu.memory_space<vmem>>, vector<8x32xf32>,
    return
  }
  func.func @transform_0(%arg0: i32) -> (i32, i32) {
    %c0_i32 = arith.constant 0 : i32
    %c0_i32_0 = arith.constant 0 : i32
    return %arg0, %c0_i32 : i32, i32
  }
  func.func @transform_1(%arg0: i32) -> (i32, i32) {
    %c0_i32 = arith.constant 0 : i32
    %c0_i32_0 = arith.constant 0 : i32
    %c0_i32_1 = arith.constant 0 : i32
    return %c0_i32, %c0_i32_0 : i32, i32
  }
  func.func @transform_2(%arg0: i32) -> (i32, i32) {
    %c0_i32 = arith.constant 0 : i32
    %c0_i32_0 = arith.constant 0 : i32
    return %arg0, %c0_i32 : i32, i32
  }
}

</mosaic_0001>

<llo_original>
// kernel: tpu_custom_call.1
$region0: #{tpu_custom_call.1}
  #allocation0 [shape = 'u32[]', space=smem, size = 0x4, offset = 0x4, fixed_abs, tag = 'smem constant byte address 0x4 - core index']
  #allocation1 [shape = 'u32[72,128]{1,0:T(1,128)}', space=vmem, size = 0x9000, scoped, tag = 'internal scratch']
  %s0 = inlined_call_operand.vmem [shape: f32[8,2], index: 0, kind: input, shape index: {}]
  %s1 = inlined_call_operand.vmem [shape: f32[2,32], index: 1, kind: input, shape index: {}]
  %s2 = inlined_call_operand.hbm [shape: f32[8,64], index: 2, kind: output, shape index: {}]
  %s3 = sld [smem:[#allocation0]]
  $region18: #{tpu_custom_call.1} parent=0
    _
  %s5 = ssub.s32 1, %s3
  %s6 = scalar_select 0, %s5, %s3
  $region1: #{tpu_custom_call.1} parent=0
    #allocation2 [shape = 'u8[4096]{0}', space=vmem, size = 0x1000, scoped, tag = 'output window, operand 0, single buffered']
    #allocation3 [shape = 's32[1]{0}', space=sflag, size = 0x4, scoped, tag = 'scoped memory for tpu_custom_call.1']
    %7 = vsyncpa [#allocation3], 0
    // Predicated region
    $region2: #{tpu_custom_call.1} parent=1 // pred_check
      _
    $region3: #{tpu_custom_call.1} parent=1 // pred_check_branch
      %9 = sbr.rel (0) target = $region5
    $region4: #{tpu_custom_call.1} parent=1 // pred_region
      _
    $region5: #{tpu_custom_call.1} parent=1 // pred_fallthru
      _
    // Predicated region
    $region6: #{tpu_custom_call.1} parent=1 // pred_check
      _
    $region7: #{tpu_custom_call.1} parent=1 // pred_check_branch
      %11 = sbr.rel (0) target = $region9
    $region8: #{tpu_custom_call.1} parent=1 // pred_region
      _
    $region9: #{tpu_custom_call.1} parent=1 // pred_fallthru
      _
    %v12 = vld [vmem:[%s0] sm:$0xff]
    %v13 = vld [vmem:[%s1] sm:$0x1]
    %v14 = vld [vmem:[%s1 + $0x1] sm:$0x1]
    %16 = vset.pattern.permute.xlu0 0
    %17 = vperm.xlu0 %16, %v12
    %v18 = vpop.permute.xlu0 %17
    %v20 = vperm.slane %v13, 0
    %v21 = vmul.f32 %v18, %v20
    %22 = vset.pattern.permute.xlu0 1
    %23 = vperm.xlu0 %22, %v12
    %v24 = vpop.permute.xlu0 %23
    %v26 = vperm.slane %v14, 0
    %v27 = vmul.f32 %v24, %v26
    %v28 = vadd.f32 %v21, %v27
    %v29 = vand.u32 2147483647, %v28
    %vm30 = vcmp.le.f32.partialorder %v29, 0.7853982
    %vm31 = vcmp.lt.s32.totalorder %v28, 0
    %v32 = vand.u32 %v28, 2139095040
    %v33 = vshrl.u32 %v32, 23
    %v34 = vsub.s32 %v33, 127
    %v35 = vand.u32 2147483647, %v28
    %v36 = vand.u32 %v35, 8388607
    %v37 = vor.u32 %v36, 8388608
    %v38 = vsub.s32 0, %v37
    %v39 = vadd.s32 %v34, 1
    %vm40 = vcmp.gt.s32.totalorder %v39, 0
    %v41 = vsel %vm40, %v39, 0
    %v42 = vshrl.u32 %v41, 5
    %v43 = vand.u32 %v41, 31
    %v44 = vsub.s32 32, %v43
    %v45 = vshrl.u32 683565275, %v44
    %v46 = vshll.u32 683565275, %v43
    %v47 = vshrl.u32 2475754826, %v44
    %v48 = vor.u32 %v46, %v47
    %v49 = vshll.u32 2475754826, %v43
    %v50 = vshrl.u32 2131351028, %v44
    %v51 = vor.u32 %v49, %v50
    %v52 = vshll.u32 2131351028, %v43
    %v53 = vshrl.u32 2102212464, %v44
    %v54 = vor.u32 %v52, %v53
    %v55 = vshll.u32 2102212464, %v43
    %v56 = vshrl.u32 920167782, %v44
    %v57 = vor.u32 %v55, %v56
    %v58 = vshll.u32 920167782, %v43
    %v59 = vshrl.u32 1326507024, %v44
    %v60 = vor.u32 %v58, %v59
    %vm61 = vcmp.lt.s32.totalorder %v42, 1
    %vm62 = vcmp.lt.s32.totalorder %v42, 2
    %vm63 = vcmp.lt.s32.totalorder %v42, 3
    %vm64 = vcmp.lt.s32.totalorder %v42, 4
    %v65 = vsel %vm61, %v45, %v48
    %v66 = vsel %vm64, %v54, 2102212464
    %v67 = vsel %vm63, %v51, %v66
    %v68 = vsel %vm62, %v65, %v67
    %v69 = vsel %vm61, %v48, %v51
    %v70 = vsel %vm64, %v57, 920167782
    %v71 = vsel %vm63, %v54, %v70
    %v72 = vsel %vm62, %v69, %v71
    %v73 = vsel %vm61, %v51, %v54
    %v74 = vsel %vm64, %v60, 1326507024
    %v75 = vsel %vm63, %v57, %v74
    %v76 = vsel %vm62, %v73, %v75
    %v77 = vshll.u32 %v37, 8
    %v78 = vand.u32 %v77, 65535
    %v79 = vshrl.u32 %v77, 16
    %v80 = vand.u32 %v76, 65535
    %v81 = vshrl.u32 %v76, 16
    %v82 = vmul.u32 %v78, %v80
    %v83 = vmul.u32 %v78, %v81
    %v84 = vmul.u32 %v79, %v80
    %v85 = vmul.u32 %v79, %v81
    %v86 = vshll.u32 %v83, 16
    %v87 = vshrl.u32 %v83, 16
    %v88 = vshll.u32 %v84, 16
    %v89 = vshrl.u32 %v84, 16
    %vm90 = vc.u32 %v82, %v86
    %v91 = vsel %vm90, 1, 0
    %v92 = vadd.s32 %v82, %v86
    %v93 = vadd.s32 %v85, %v91
    %vm94 = vc.u32 %v92, %v88
    %v95 = vsel %vm94, 1, 0
    %v96 = vadd.s32 %v92, %v88
    %v97 = vadd.s32 %v93, %v95
    %v98 = vadd.s32 %v97, %v87
    %v99 = vadd.s32 %v98, %v89
    %v100 = vand.u32 %v77, 65535
    %v101 = vshrl.u32 %v77, 16
    %v102 = vand.u32 %v72, 65535
    %v103 = vshrl.u32 %v72, 16
    %v104 = vmul.u32 %v100, %v102
    %v105 = vmul.u32 %v100, %v103
    %v106 = vmul.u32 %v101, %v102
    %v107 = vmul.u32 %v101, %v103
    %v108 = vshll.u32 %v105, 16
    %v109 = vshrl.u32 %v105, 16
    %v110 = vshll.u32 %v106, 16
    %v111 = vshrl.u32 %v106, 16
    %vm112 = vc.u32 %v104, %v108
    %v113 = vsel %vm112, 1, 0
    %v114 = vadd.s32 %v104, %v108
    %v115 = vadd.s32 %v107, %v113
    %vm116 = vc.u32 %v114, %v110
    %v117 = vsel %vm116, 1, 0
    %v118 = vadd.s32 %v114, %v110
    %v119 = vadd.s32 %v115, %v117
    %v120 = vadd.s32 %v119, %v109
    %v121 = vadd.s32 %v120, %v111
    %v122 = vmul.u32 %v77, %v68
    %v123 = vadd.s32 %v99, %v118
    %vm124 = vc.u32 %v99, %v118
    %v125 = vadd.s32 %v121, 1
    %v126 = vsel %vm124, %v125, %v121
    %v127 = vadd.s32 %v122, %v126
    %v128 = vadd.s32 %v127, 536870912
    %v129 = vshrl.u32 %v128, 30
    %v130 = vshll.u32 %v129, 30
    %v131 = vsub.s32 %v127, %v130
    %vm132 = vcmp.lt.s32.totalorder %v131, 0
    %v133 = vsub.s32 0, %v131
    %v134 = vsel %vm132, %v133, %v131
    %v135 = vclz %v134
    %v136 = vsub.s32 %v135, 2
    %vm137 = vcmp.gt.s32.totalorder 0, %v136
    %v138 = vsel %vm137, 0, %v136
    %v139 = vsub.s32 32, %v138
    %v140 = vshll.u32 %v131, %v138
    %v141 = vshrl.u32 %v123, %v139
    %v142 = vor.u32 %v140, %v141
    %v143 = vsub.s32 4294967266, %v138
    %v144 = vadd.s32 %v143, 127
    %v145 = vshll.u32 %v144, 23
    %v146 = vor.u32 4788187, %v145
    %v147 = vand.u32 2147483647, %v146
    %v149 = vcvt.s32.f32 %v142
    %v150 = vmul.f32 %v149, %v147
    %v151 = vxor.u32 %v150, 2147483648
    %v152 = vsel %vm31, %v151, %v150
    %v153 = vsub.s32 4, %v129
    %v154 = vsel %vm31, %v153, %v129
    %v155 = vsel %vm30, %v28, %v152
    %v156 = vsel %vm30, 0, %v154
    %v157 = vmul.f32 %v155, %v155
    %v158 = vmul.f32 %v157, -0.001358992
    %v159 = vadd.f32 %v158, 0.041655596
    %v160 = vmul.f32 %v157, %v159
    %v161 = vadd.f32 %v160, -0.4999988
    %v162 = vmul.f32 %v157, %v161
    %v163 = vadd.f32 1.0, %v162
    %v164 = vmul.f32 %v155, %v155
    %v165 = vmul.f32 %v164, -0.00019511016
    %v166 = vadd.f32 %v165, 0.008332121
    %v167 = vmul.f32 %v164, %v166
    %v168 = vadd.f32 %v167, -0.16666654
    %v169 = vmul.f32 %v164, %v168
    %v170 = vadd.f32 %v169, 1.0
    %v171 = vmul.f32 %v170, %v155
    %vm172 = vweird.f32 %v28
    %v173 = vadd.s32 %v156, 3
    %v174 = vand.u32 %v173, 3
    %vm175 = vcmp.lt.s32.totalorder %v174, 2
    %vm176 = vcmp.eq.s32.totalorder %v174, 0
    %v177 = vxor.u32 %v171, 2147483648
    %v178 = vsel %vm176, %v163, %v177
    %vm179 = vcmp.eq.s32.totalorder %v174, 2
    %v180 = vxor.u32 %v163, 2147483648
    %v181 = vsel %vm179, %v180, %v171
    %v182 = vsel %vm175, %v178, %v181
    %v183 = vsel %vm172, nan, %v182
    %vm184 = vcmask 261120
    %185 = vst.msk [vmem:[#allocation2] sm:$0xff] %vm184, %v183
    %v186 = vand.u32 2147483647, %v28
    %vm187 = vcmp.le.f32.partialorder %v186, 0.7853982
    %vm188 = vcmp.lt.s32.totalorder %v28, 0
    %v189 = vand.u32 %v28, 2139095040
    %v190 = vshrl.u32 %v189, 23
    %v191 = vsub.s32 %v190, 127
    %v192 = vand.u32 2147483647, %v28
    %v193 = vand.u32 %v192, 8388607
    %v194 = vor.u32 %v193, 8388608
    %v195 = vsub.s32 0, %v194
    %v196 = vadd.s32 %v191, 1
    %vm197 = vcmp.gt.s32.totalorder %v196, 0
    %v198 = vsel %vm197, %v196, 0
    %v199 = vshrl.u32 %v198, 5
    %v200 = vand.u32 %v198, 31
    %v201 = vsub.s32 32, %v200
    %v202 = vshrl.u32 683565275, %v201
    %v203 = vshll.u32 683565275, %v200
    %v204 = vshrl.u32 2475754826, %v201
    %v205 = vor.u32 %v203, %v204
    %v206 = vshll.u32 2475754826, %v200
    %v207 = vshrl.u32 2131351028, %v201
    %v208 = vor.u32 %v206, %v207
    %v209 = vshll.u32 2131351028, %v200
    %v210 = vshrl.u32 2102212464, %v201
    %v211 = vor.u32 %v209, %v210
    %v212 = vshll.u32 2102212464, %v200
    %v213 = vshrl.u32 920167782, %v201
    %v214 = vor.u32 %v212, %v213
    %v215 = vshll.u32 920167782, %v200
    %v216 = vshrl.u32 1326507024, %v201
    %v217 = vor.u32 %v215, %v216
    %vm218 = vcmp.lt.s32.totalorder %v199, 1
    %vm219 = vcmp.lt.s32.totalorder %v199, 2
    %vm220 = vcmp.lt.s32.totalorder %v199, 3
    %vm221 = vcmp.lt.s32.totalorder %v199, 4
    %v222 = vsel %vm218, %v202, %v205
    %v223 = vsel %vm221, %v211, 2102212464
    %v224 = vsel %vm220, %v208, %v223
    %v225 = vsel %vm219, %v222, %v224
    %v226 = vsel %vm218, %v205, %v208
    %v227 = vsel %vm221, %v214, 920167782
    %v228 = vsel %vm220, %v211, %v227
    %v229 = vsel %vm219, %v226, %v228
    %v230 = vsel %vm218, %v208, %v211
    %v231 = vsel %vm221, %v217, 1326507024
    %v232 = vsel %vm220, %v214, %v231
    %v233 = vsel %vm219, %v230, %v232
    %v234 = vshll.u32 %v194, 8
    %v235 = vand.u32 %v234, 65535
    %v236 = vshrl.u32 %v234, 16
    %v237 = vand.u32 %v233, 65535
    %v238 = vshrl.u32 %v233, 16
    %v239 = vmul.u32 %v235, %v237
    %v240 = vmul.u32 %v235, %v238
    %v241 = vmul.u32 %v236, %v237
    %v242 = vmul.u32 %v236, %v238
    %v243 = vshll.u32 %v240, 16
    %v244 = vshrl.u32 %v240, 16
    %v245 = vshll.u32 %v241, 16
    %v246 = vshrl.u32 %v241, 16
    %vm247 = vc.u32 %v239, %v243
    %v248 = vsel %vm247, 1, 0
    %v249 = vadd.s32 %v239, %v243
    %v250 = vadd.s32 %v242, %v248
    %vm251 = vc.u32 %v249, %v245
    %v252 = vsel %vm251, 1, 0
    %v253 = vadd.s32 %v249, %v245
    %v254 = vadd.s32 %v250, %v252
    %v255 = vadd.s32 %v254, %v244
    %v256 = vadd.s32 %v255, %v246
    %v257 = vand.u32 %v234, 65535
    %v258 = vshrl.u32 %v234, 16
    %v259 = vand.u32 %v229, 65535
    %v260 = vshrl.u32 %v229, 16
    %v261 = vmul.u32 %v257, %v259
    %v262 = vmul.u32 %v257, %v260
    %v263 = vmul.u32 %v258, %v259
    %v264 = vmul.u32 %v258, %v260
    %v265 = vshll.u32 %v262, 16
    %v266 = vshrl.u32 %v262, 16
    %v267 = vshll.u32 %v263, 16
    %v268 = vshrl.u32 %v263, 16
    %vm269 = vc.u32 %v261, %v265
    %v270 = vsel %vm269, 1, 0
    %v271 = vadd.s32 %v261, %v265
    %v272 = vadd.s32 %v264, %v270
    %vm273 = vc.u32 %v271, %v267
    %v274 = vsel %vm273, 1, 0
    %v275 = vadd.s32 %v271, %v267
    %v276 = vadd.s32 %v272, %v274
    %v277 = vadd.s32 %v276, %v266
    %v278 = vadd.s32 %v277, %v268
    %v279 = vmul.u32 %v234, %v225
    %v280 = vadd.s32 %v256, %v275
    %vm281 = vc.u32 %v256, %v275
    %v282 = vadd.s32 %v278, 1
    %v283 = vsel %vm281, %v282, %v278
    %v284 = vadd.s32 %v279, %v283
    %v285 = vadd.s32 %v284, 536870912
    %v286 = vshrl.u32 %v285, 30
    %v287 = vshll.u32 %v286, 30
    %v288 = vsub.s32 %v284, %v287
    %vm289 = vcmp.lt.s32.totalorder %v288, 0
    %v290 = vsub.s32 0, %v288
    %v291 = vsel %vm289, %v290, %v288
    %v292 = vclz %v291
    %v293 = vsub.s32 %v292, 2
    %vm294 = vcmp.gt.s32.totalorder 0, %v293
    %v295 = vsel %vm294, 0, %v293
    %v296 = vsub.s32 32, %v295
    %v297 = vshll.u32 %v288, %v295
    %v298 = vshrl.u32 %v280, %v296
    %v299 = vor.u32 %v297, %v298
    %v300 = vsub.s32 4294967266, %v295
    %v301 = vadd.s32 %v300, 127
    %v302 = vshll.u32 %v301, 23
    %v303 = vor.u32 4788187, %v302
    %v304 = vand.u32 2147483647, %v303
    %v306 = vcvt.s32.f32 %v299
    %v307 = vmul.f32 %v306, %v304
    %v308 = vxor.u32 %v307, 2147483648
    %v309 = vsel %vm188, %v308, %v307
    %v310 = vsub.s32 4, %v286
    %v311 = vsel %vm188, %v310, %v286
    %v312 = vsel %vm187, %v28, %v309
    %v313 = vsel %vm187, 0, %v311
    %v314 = vmul.f32 %v312, %v312
    %v315 = vmul.f32 %v314, -0.001358992
    %v316 = vadd.f32 %v315, 0.041655596
    %v317 = vmul.f32 %v314, %v316
    %v318 = vadd.f32 %v317, -0.4999988
    %v319 = vmul.f32 %v314, %v318
    %v320 = vadd.f32 1.0, %v319
    %v321 = vmul.f32 %v312, %v312
    %v322 = vmul.f32 %v321, -0.00019511016
    %v323 = vadd.f32 %v322, 0.008332121
    %v324 = vmul.f32 %v321, %v323
    %v325 = vadd.f32 %v324, -0.16666654
    %v326 = vmul.f32 %v321, %v325
    %v327 = vadd.f32 %v326, 1.0
    %v328 = vmul.f32 %v327, %v312
    %vm329 = vweird.f32 %v28
    %v330 = vand.u32 %v313, 3
    %vm331 = vcmp.lt.s32.totalorder %v330, 2
    %vm332 = vcmp.eq.s32.totalorder %v330, 0
    %v333 = vxor.u32 %v328, 2147483648
    %v334 = vsel %vm332, %v320, %v333
    %vm335 = vcmp.eq.s32.totalorder %v330, 2
    %v336 = vxor.u32 %v320, 2147483648
    %v337 = vsel %vm335, %v336, %v328
    %v338 = vsel %vm331, %v334, %v337
    %v339 = vsel %vm329, nan, %v338
    %341 = vrot.lane.b32.xlu0 %v339, 32
    %v342 = vpop.permute.xlu0 %341
    %vm344 = vcmask 523520
    %345 = vst.msk [vmem:[#allocation2] sm:$0xff] %vm344, %v342
    // Predicated region
    $region10: #{tpu_custom_call.1} parent=1 // pred_check
      _
    $region11: #{tpu_custom_call.1} parent=1 // pred_check_branch
      %347 = sbr.rel (0) target = $region13
    $region12: #{tpu_custom_call.1} parent=1 // pred_region
      %349 = vsyncadd [#allocation3], 0
      %s351 = sshll.u32 [#allocation2], 4
      %s352 = int_to_ptr.vmem [resolvable:$true] %s351
      %s353 = sshll.u32 %s2, 4
      %s354 = int_to_ptr.hbm [resolvable:$true] %s353
      %356 = dma.vmem_to_hbm [thread:$0]  %s352, 128, %s354, [#allocation3]
    $region13: #{tpu_custom_call.1} parent=1 // pred_fallthru
      _
    // Predicated region
    $region14: #{tpu_custom_call.1} parent=1 // pred_check
      _
    $region15: #{tpu_custom_call.1} parent=1 // pred_check_branch
      %358 = sbr.rel (0) target = $region17
    $region16: #{tpu_custom_call.1} parent=1 // pred_region
      %360 = dma.done [#allocation3], 128
    $region17: #{tpu_custom_call.1} parent=1 // pred_fallthru
      _
    %361 = vsyncpa [#allocation3], 1

</llo_original>
